<compile_context>
chip_gen: v5e
topology: v5e:2x2
jax: 0.10.0
libtpu: 0.0.40
codegen_flags: <defaults>
</compile_context>

<pallas_src>
import math

import jax
import jax.numpy as jnp
from jax.experimental import pallas as pl
from jax.experimental.pallas import tpu as pltpu


# ---------------------------------------------------------------------------
# helpers shared by the Pallas wrapper and the pure-JAX reference
# ---------------------------------------------------------------------------
def _rotate_half(v):
    """PyTorch rotate_half on the last axis: out[2k] = -v[2k+1], out[2k+1] = v[2k]."""
    ve = v[..., 0::2]
    vo = v[..., 1::2]
    return jnp.stack([-vo, ve], axis=-1).reshape(v.shape)


def _sincos_table(max_len, d_model, base):
    """sin/cos buffers exactly as built in the PyTorch modules: (max_len, d_model//2)."""
    inv_freq = 1.0 / (base ** (jnp.arange(0, d_model, 2, dtype=jnp.float32) / d_model))
    positions = jnp.arange(max_len, dtype=jnp.float32)
    ang = positions[:, None] * inv_freq[None, :]
    return jnp.sin(ang), jnp.cos(ang)


# ---------------------------------------------------------------------------
# Pallas kernel: fused circular-conv token embedding + all four rotary stages
# ---------------------------------------------------------------------------
def _data_embedding_kernel(x3_ref, wc_ref, wr_ref, bc_ref, br_ref,
                           c_ref, s_ref, o_ref):
    """One (seq_tile, d_model) output tile for one batch element.

    x3_ref : (1, T, 3*c_in) bf16   x rows at (t-1, t, t+1) (circular), concatenated
    wc_ref : (3*c_in, d)    bf16   conv taps [W0; W1; W2]
    wr_ref : (3*c_in, d)    bf16   same taps with rotate_half applied to the columns
    bc_ref : (1, d)         f32    conv bias
    br_ref : (1, d)         f32    rotate_half(conv bias)
    c_ref  : (T, d)         f32    combined RoPE "cos" table for these positions
    s_ref  : (T, d)         f32    combined RoPE "sin" table for these positions
    o_ref  : (1, T, d)      f32
    """
    x3 = x3_ref[0]                                                     # (T, 3*c_in)
    # conv(x) and rotate_half(conv(x)) as two MXU matmuls (f32 accumulation).
    y = jnp.dot(x3, wc_ref[...], preferred_element_type=jnp.float32) + bc_ref[...]
    yr = jnp.dot(x3, wr_ref[...], preferred_element_type=jnp.float32) + br_ref[...]
    # out = conv(x) * C_comb + rotate_half(conv(x)) * S_comb
    o_ref[0] = y * c_ref[...] + yr * s_ref[...]


def _choose_seq_tile(seq_len, d_model, c_in):
    """Largest 16-aligned sequence tile whose double-buffered blocks fit a ~16 MiB
    budget (well inside the 32 MiB scoped VMEM we request explicitly)."""
    budget = 16 * 1024 * 1024
    # double-buffered per-row bytes: bf16 x3 block + f32 (C, S, out) blocks
    bytes_per_row = 2 * (2 * 3 * c_in + 4 * 3 * d_model)
    t = budget // max(bytes_per_row, 1)
    t = max(16, min(1024, t))
    t = (t // 16) * 16
    return seq_len if t >= seq_len else t


def data_embedding_forward(x, x_mark, params, *, seq_tile=None):
    """Pallas equivalent of DataEmbedding.forward(x, x_mark).

    x      : (B, L, c_in) float32
    x_mark : accepted but unused (DataEmbedding.forward never applies the temporal
             or positional embeddings it constructs).
    params : dict from init_data_embedding_params().
    Returns (B, L, d_model) float32.
    """
    del x_mark  # unused by the original forward
    B, L, c_in = x.shape
    conv_w = params["conv_w"]                       # (d_model, c_in, 3)
    d_model = conv_w.shape[0]
    if d_model % 2 != 0:
        raise ValueError("d_model must be even for ROPE.")
    if L % 7 != 0:
        raise ValueError("seq_len must be divisible by 7 (channel RoPE repeat).")

    f32 = jnp.float32
    bf16 = jnp.bfloat16
    rep2 = lambda t: jnp.repeat(t, 2, axis=-1)      # torch.repeat_interleave(., 2, -1)

    # --- collapse all four RoPE stages into one (C_comb, S_comb) pair per position ---
    # stage P (positional, base 10000): learnable + fixed tables summed
    Cp = rep2(params["rpe_cos"][:L] + params["rpe_fixed_cos"][:L])              # (L, d)
    Sp = rep2(params["rpe_sin"][:L] + params["rpe_fixed_sin"][:L])
    # stage C (channel, base 50000): rows [:7] tiled along the sequence
    Cc = jnp.tile(rep2(params["chan_fixed_cos"][:7] + params["chan_learn_cos"][:7]),
                  (L // 7, 1))
    Sc = jnp.tile(rep2(params["chan_fixed_sin"][:7] + params["chan_learn_sin"][:7]),
                  (L // 7, 1))
    # applying stage P then stage C == one rotary stage with angle-added tables
    C_comb = (Cp * Cc - Sp * Sc).astype(f32)
    S_comb = (Sp * Cc + Cp * Sc).astype(f32)

    # --- fold the circular conv + rotate_half into matmul weights ---
    W0 = conv_w[:, :, 0].T                          # (c_in, d_model), tap at t-1
    W1 = conv_w[:, :, 1].T                          # tap at t
    W2 = conv_w[:, :, 2].T                          # tap at t+1
    Wc = jnp.concatenate([W0, W1, W2], axis=0)      # (3*c_in, d_model)
    bc = params["conv_b"].reshape(1, d_model).astype(f32)
    Wr = _rotate_half(Wc)            # rotate_half(x @ Wc + bc) == x @ Wr + br
    br = _rotate_half(bc)

    # build the unrolled conv input already in bf16 (halves the x3 HBM traffic)
    xb = x.astype(bf16)
    x3 = jnp.concatenate(
        [jnp.roll(xb, 1, axis=1), xb, jnp.roll(xb, -1, axis=1)], axis=-1)  # (B,L,3*c_in)

    T = seq_tile if seq_tile is not None else _choose_seq_tile(L, d_model, c_in)
    # seq tiles on the outer grid axis so the (C, S) table / weight blocks stay
    # resident across the inner batch axis (fetched once per L-tile, not per step).
    grid = (pl.cdiv(L, T), B)

    out = pl.pallas_call(
        _data_embedding_kernel,
        out_shape=jax.ShapeDtypeStruct((B, L, d_model), f32),
        grid_spec=pltpu.PrefetchScalarGridSpec(
            num_scalar_prefetch=0,
            grid=grid,
            in_specs=[
                pl.BlockSpec((1, T, 3 * c_in), lambda l, b: (b, l, 0)),
                pl.BlockSpec((3 * c_in, d_model), lambda l, b: (0, 0)),
                pl.BlockSpec((3 * c_in, d_model), lambda l, b: (0, 0)),
                pl.BlockSpec((1, d_model), lambda l, b: (0, 0)),
                pl.BlockSpec((1, d_model), lambda l, b: (0, 0)),
                pl.BlockSpec((T, d_model), lambda l, b: (l, 0)),
                pl.BlockSpec((T, d_model), lambda l, b: (l, 0)),
            ],
            out_specs=pl.BlockSpec((1, T, d_model), lambda l, b: (b, l, 0)),
        ),
        compiler_params=pltpu.CompilerParams(
            dimension_semantics=("parallel", "parallel"),
            vmem_limit_bytes=32 * 1024 * 1024),
    )(x3, Wc.astype(bf16), Wr.astype(bf16), bc, br, C_comb, S_comb)

    # TODO(synk): nn.Dropout(p=0.1) is applied as inference-mode identity; a
    # training-mode mask would use pltpu.prng_seed / pltpu.prng_random_bits in-kernel.
    return out


# ---------------------------------------------------------------------------
# parameter construction mirroring DataEmbedding.__init__ (forward-relevant parts)
# ---------------------------------------------------------------------------
def init_data_embedding_params(key, c_in, d_model, max_len=5000):
    kw, kb, k1, k2, k3, k4 = jax.random.split(key, 6)
    fan_in = c_in * 3
    gain = math.sqrt(2.0 / (1.0 + 0.01 ** 2))       # kaiming_normal, leaky_relu
    conv_w = (gain / math.sqrt(fan_in)) * jax.random.normal(
        kw, (d_model, c_in, 3), jnp.float32)
    bound = 1.0 / math.sqrt(fan_in)
    conv_b = jax.random.uniform(kb, (d_model,), jnp.float32, -bound, bound)

    sin10k, cos10k = _sincos_table(max_len, d_model, 10000.0)   # rpe / rpe_fixed
    sin50k, cos50k = _sincos_table(max_len, d_model, 50000.0)   # channel embeddings

    # Learnable tables start equal to the fixed ones in PyTorch; perturb slightly so
    # the kernel's handling of distinct learnable tables is actually exercised.
    eps = 0.02
    return {
        "conv_w": conv_w,
        "conv_b": conv_b,
        "rpe_sin": sin10k + eps * jax.random.normal(k1, sin10k.shape, jnp.float32),
        "rpe_cos": cos10k + eps * jax.random.normal(k2, cos10k.shape, jnp.float32),
        "rpe_fixed_sin": sin10k,
        "rpe_fixed_cos": cos10k,
        "chan_fixed_sin": sin50k,
        "chan_fixed_cos": cos50k,
        "chan_learn_sin": sin50k + eps * jax.random.normal(k3, sin50k.shape, jnp.float32),
        "chan_learn_cos": cos50k + eps * jax.random.normal(k4, cos50k.shape, jnp.float32),
    }


# ---------------------------------------------------------------------------
# pure-JAX reference: literal transliteration of the PyTorch forward
# ---------------------------------------------------------------------------
def _reference_forward(x, params):
    B, L, c_in = x.shape
    W = params["conv_w"]
    b = params["conv_b"]
    hp = jax.lax.Precision.HIGHEST
    rep2 = lambda t: jnp.repeat(t, 2, axis=-1)

    # TokenEmbedding: circular Conv1d over the sequence axis (same bf16 operand
    # rounding as the kernel's MXU path; accumulation in f32).
    xb = x.astype(jnp.bfloat16)
    Wb = W.astype(jnp.bfloat16)
    xp = jnp.roll(xb, 1, axis=1)
    xn = jnp.roll(xb, -1, axis=1)
    mm = lambda a, w: jnp.einsum("blc,cd->bld", a, w, precision=hp,
                                 preferred_element_type=jnp.float32)
    v = mm(xp, Wb[:, :, 0].T) + mm(xb, Wb[:, :, 1].T) + mm(xn, Wb[:, :, 2].T)
    v = v + b[None, None, :]

    def rope(v, sin_t, cos_t):           # RotaryPositionalEmbedding(.Fixed).forward
        s = rep2(sin_t[:L])[None]
        c = rep2(cos_t[:L])[None]
        return v * c + _rotate_half(v) * s

    def chan(v, sin_t, cos_t):           # RotaryChannelEmbedding{Fixed,Learnable}.forward
        s = jnp.tile(rep2(sin_t[:7]), (L // 7, 1))[None]
        c = jnp.tile(rep2(cos_t[:7]), (L // 7, 1))[None]
        return v * c + _rotate_half(v) * s

    v = rope(v, params["rpe_sin"], params["rpe_cos"]) \
        + rope(v, params["rpe_fixed_sin"], params["rpe_fixed_cos"])
    v = chan(v, params["chan_fixed_sin"], params["chan_fixed_cos"]) \
        + chan(v, params["chan_learn_sin"], params["chan_learn_cos"])
    return v                              # Dropout -> identity at inference


if __name__ == "__main__":
    key = jax.random.PRNGKey(0)
    kx, km, kp = jax.random.split(key, 3)
    # seq_len must be divisible by 7 (the PyTorch channel RoPE tiling requires it).
    batch, seq_len, c_in, d_model = 2, 56, 4, 32
    x = jax.random.normal(kx, (batch, seq_len, c_in), dtype=jnp.float32)
    x_mark = jax.random.normal(km, (batch, seq_len, 4), dtype=jnp.float32)  # unused
    params = init_data_embedding_params(kp, c_in, d_model)

    out = jax.jit(data_embedding_forward)(x, x_mark, params)
    out = jax.block_until_ready(out)

    ref = _reference_forward(x, params)
    assert out.shape == (batch, seq_len, d_model), out.shape
    assert out.dtype == jnp.float32
    max_err = float(jnp.max(jnp.abs(out - ref)))
    assert jnp.allclose(out, ref, atol=2e-3, rtol=2e-3), \
        f"mismatch vs reference (max abs err {max_err})"
    print("KERNEL_OK")
</pallas_src>

<mosaic_0001>
module attributes {stable_mosaic.version = 11 : i64} {
  func.func @_data_embedding_kernel(%arg0: i32, %arg1: i32, %arg2: memref<1x56x12xbf16, #tpu.memory_space<vmem>>, %arg3: memref<12x32xbf16, #tpu.memory_space<vmem>>, %arg4: memref<12x32xbf16, #tpu.memory_space<vmem>>, %arg5: memref<1x32xf32, #tpu.memory_space<vmem>>, %arg6: memref<1x32xf32, #tpu.memory_space<vmem>>, %arg7: memref<56x32xf32, #tpu.memory_space<vmem>>, %arg8: memref<56x32xf32, #tpu.memory_space<vmem>>, %arg9: memref<1x56x32xf32, #tpu.memory_space<vmem>>) attributes {dimension_semantics = [#tpu.dimension_semantics<parallel>, #tpu.dimension_semantics<parallel>], iteration_bounds = array<i64: 1, 2>, scalar_prefetch = 0 : i64, scratch_operands = 0 : i64, tpu.core_type = #tpu.core_type<tc>, window_params = [{transform_indices = @transform_0, window_bounds = array<i64: 1, 56, 12>}, {pipeline_mode = #tpu.pipeline_mode<synchronous>, transform_indices = @transform_1, window_bounds = array<i64: 12, 32>}, {pipeline_mode = #tpu.pipeline_mode<synchronous>, transform_indices = @transform_2, window_bounds = array<i64: 12, 32>}, {pipeline_mode = #tpu.pipeline_mode<synchronous>, transform_indices = @transform_3, window_bounds = array<i64: 1, 32>}, {pipeline_mode = #tpu.pipeline_mode<synchronous>, transform_indices = @transform_4, window_bounds = array<i64: 1, 32>}, {transform_indices = @transform_5, window_bounds = array<i64: 56, 32>}, {transform_indices = @transform_6, window_bounds = array<i64: 56, 32>}, {transform_indices = @transform_7, window_bounds = array<i64: 1, 56, 32>}]} {
    %c0 = arith.constant 0 : index
    %c0_0 = arith.constant 0 : index
    %c0_1 = arith.constant 0 : index
    %0 = vector.load %arg2[%c0, %c0_0, %c0_1] : memref<1x56x12xbf16, #tpu.memory_space<vmem>>, vector<1x56x12xbf16>
    %1 = vector.shape_cast %0 : vector<1x56x12xbf16> to vector<56x12xbf16>
    %c0_2 = arith.constant 0 : index
    %c0_3 = arith.constant 0 : index
    %2 = vector.load %arg3[%c0_2, %c0_3] : memref<12x32xbf16, #tpu.memory_space<vmem>>, vector<12x32xbf16>
    %cst = arith.constant dense<0.000000e+00> : vector<56x32xf32>
    %3 = tpu.matmul %1, %2, %cst {dimension_numbers = #tpu.dot_dimension_numbers<[1], [0], [0], [1], [0, 0, 1, 1], [], []>} : vector<56x12xbf16>, vector<12x32xbf16>, vector<56x32xf32> -> vector<56x32xf32>
    %c0_4 = arith.constant 0 : index
    %c0_5 = arith.constant 0 : index
    %4 = vector.load %arg5[%c0_4, %c0_5] : memref<1x32xf32, #tpu.memory_space<vmem>>, vector<1x32xf32>
    %5 = vector.broadcast %4 : vector<1x32xf32> to vector<56x32xf32>
    %6 = arith.addf %3, %5 : vector<56x32xf32>
    %c0_6 = arith.constant 0 : index
    %c0_7 = arith.constant 0 : index
    %7 = vector.load %arg4[%c0_6, %c0_7] : memref<12x32xbf16, #tpu.memory_space<vmem>>, vector<12x32xbf16>
    %cst_8 = arith.constant dense<0.000000e+00> : vector<56x32xf32>
    %8 = tpu.matmul %1, %7, %cst_8 {dimension_numbers = #tpu.dot_dimension_numbers<[1], [0], [0], [1], [0, 0, 1, 1], [], []>} : vector<56x12xbf16>, vector<12x32xbf16>, vector<56x32xf32> -> vector<56x32xf32>
    %c0_9 = arith.constant 0 : index
    %c0_10 = arith.constant 0 : index
    %9 = vector.load %arg6[%c0_9, %c0_10] : memref<1x32xf32, #tpu.memory_space<vmem>>, vector<1x32xf32>
    %10 = vector.broadcast %9 : vector<1x32xf32> to vector<56x32xf32>
    %11 = arith.addf %8, %10 : vector<56x32xf32>
    %c0_11 = arith.constant 0 : index
    %c0_12 = arith.constant 0 : index
    %12 = vector.load %arg7[%c0_11, %c0_12] : memref<56x32xf32, #tpu.memory_space<vmem>>, vector<56x32xf32>
    %13 = arith.mulf %6, %12 : vector<56x32xf32>
    %c0_13 = arith.constant 0 : index
    %c0_14 = arith.constant 0 : index
    %14 = vector.load %arg8[%c0_13, %c0_14] : memref<56x32xf32, #tpu.memory_space<vmem>>, vector<56x32xf32>
    %15 = arith.mulf %11, %14 : vector<56x32xf32>
    %16 = arith.addf %13, %15 : vector<56x32xf32>
    %c0_15 = arith.constant 0 : index
    %c0_16 = arith.constant 0 : index
    %c0_17 = arith.constant 0 : index
    %17 = vector.load %arg9[%c0_15, %c0_16, %c0_17] : memref<1x56x32xf32, #tpu.memory_space<vmem>>, vector<1x56x32xf32>
    %18 = vector.shape_cast %17 : vector<1x56x32xf32> to vector<56x32xf32>
    %19 = vector.shape_cast %16 : vector<56x32xf32> to vector<1x56x32xf32>
    tpu.vector_store %arg9[%c0_15, %c0_16, %c0_17], %19 {strides = array<i32>} : memref<1x56x32xf32, #tpu.memory_space<vmem>>, vector<1x56x32xf32>,
    return
  }
  func.func @transform_0(%arg0: i32, %arg1: i32) -> (i32, i32, i32) {
    %c0_i32 = arith.constant 0 : i32
    %c0_i32_0 = arith.constant 0 : i32
    return %arg1, %arg0, %c0_i32 : i32, i32, i32
  }
  func.func @transform_1(%arg0: i32, %arg1: i32) -> (i32, i32) {
    %c0_i32 = arith.constant 0 : i32
    %c0_i32_0 = arith.constant 0 : i32
    %c0_i32_1 = arith.constant 0 : i32
    return %c0_i32, %c0_i32_0 : i32, i32
  }
  func.func @transform_2(%arg0: i32, %arg1: i32) -> (i32, i32) {
    %c0_i32 = arith.constant 0 : i32
    %c0_i32_0 = arith.constant 0 : i32
    %c0_i32_1 = arith.constant 0 : i32
    return %c0_i32, %c0_i32_0 : i32, i32
  }
  func.func @transform_3(%arg0: i32, %arg1: i32) -> (i32, i32) {
    %c0_i32 = arith.constant 0 : i32
    %c0_i32_0 = arith.constant 0 : i32
    %c0_i32_1 = arith.constant 0 : i32
    return %c0_i32, %c0_i32_0 : i32, i32
  }
  func.func @transform_4(%arg0: i32, %arg1: i32) -> (i32, i32) {
    %c0_i32 = arith.constant 0 : i32
    %c0_i32_0 = arith.constant 0 : i32
    %c0_i32_1 = arith.constant 0 : i32
    return %c0_i32, %c0_i32_0 : i32, i32
  }
  func.func @transform_5(%arg0: i32, %arg1: i32) -> (i32, i32) {
    %c0_i32 = arith.constant 0 : i32
    %c0_i32_0 = arith.constant 0 : i32
    return %arg0, %c0_i32 : i32, i32
  }
  func.func @transform_6(%arg0: i32, %arg1: i32) -> (i32, i32) {
    %c0_i32 = arith.constant 0 : i32
    %c0_i32_0 = arith.constant 0 : i32
    return %arg0, %c0_i32 : i32, i32
  }
  func.func @transform_7(%arg0: i32, %arg1: i32) -> (i32, i32, i32) {
    %c0_i32 = arith.constant 0 : i32
    %c0_i32_0 = arith.constant 0 : i32
    return %arg1, %arg0, %c0_i32 : i32, i32, i32
  }
}

</mosaic_0001>

<llo_original>
// kernel: tile.11
$region0: #{tile.11}
  %s0 = inlined_call_operand.vmem [shape: f32[8,7,32], index: 0, kind: input, shape index: {}]
  %s1 = inlined_call_operand.vmem [shape: f32[56,32], index: 1, kind: output, shape index: {}]
  %v2 = vld [vmem:[%s0] sm:$0x7f]
  %vm3 = vcmask 261120
  %4 = vst.msk [vmem:[%s1] sm:$0x7f] %vm3, %v2
  %s5 = scalar_lea.vmem %s0, 8
  %v6 = vld [vmem:[%s5] sm:$0x7f]
  %vm7 = vcmask 261120
  %s8 = scalar_lea.vmem %s1, 7
  %9 = vst.msk [vmem:[%s8] sm:$0x7f] %vm7, %v6
  %s10 = scalar_lea.vmem %s0, 16
  %v11 = vld [vmem:[%s10] sm:$0x7f]
  %vm12 = vcmask 261120
  %s13 = scalar_lea.vmem %s1, 14
  %14 = vst.msk [vmem:[%s13] sm:$0x7f] %vm12, %v11
  %s15 = scalar_lea.vmem %s0, 24
  %v16 = vld [vmem:[%s15] sm:$0x7f]
  %vm17 = vcmask 261120
  %s18 = scalar_lea.vmem %s1, 21
  %19 = vst.msk [vmem:[%s18] sm:$0x7f] %vm17, %v16
  %s20 = scalar_lea.vmem %s0, 32
  %v21 = vld [vmem:[%s20] sm:$0x7f]
  %vm22 = vcmask 261120
  %s23 = scalar_lea.vmem %s1, 28
  %24 = vst.msk [vmem:[%s23] sm:$0x7f] %vm22, %v21
  %s25 = scalar_lea.vmem %s0, 40
  %v26 = vld [vmem:[%s25] sm:$0x7f]
  %vm27 = vcmask 261120
  %s28 = scalar_lea.vmem %s1, 35
  %29 = vst.msk [vmem:[%s28] sm:$0x7f] %vm27, %v26
  %s30 = scalar_lea.vmem %s0, 48
  %v31 = vld [vmem:[%s30] sm:$0x7f]
  %vm32 = vcmask 261120
  %s33 = scalar_lea.vmem %s1, 42
  %34 = vst.msk [vmem:[%s33] sm:$0x7f] %vm32, %v31
  %s35 = scalar_lea.vmem %s0, 56
  %v36 = vld [vmem:[%s35] sm:$0x7f]
  %vm37 = vcmask 261120
  %s38 = scalar_lea.vmem %s1, 49
  %39 = vst.msk [vmem:[%s38] sm:$0x7f] %vm37, %v36

// kernel: data_embedding_forward.1
$region0: #{data_embedding_forward.1}
  #allocation0 [shape = 'u32[]', space=smem, size = 0x4, offset = 0x4, fixed_abs, tag = 'smem constant byte address 0x4 - core index']
  #allocation1 [shape = 'u32[72,128]{1,0:T(1,128)}', space=vmem, size = 0x9000, scoped, tag = 'internal scratch']
  %s0 = inlined_call_operand.vmem [shape: bf16[2,56,12], index: 0, kind: input, shape index: {}]
  %s1 = inlined_call_operand.vmem [shape: bf16[12,32], index: 1, kind: input, shape index: {}]
  %s2 = inlined_call_operand.vmem [shape: bf16[12,32], index: 2, kind: input, shape index: {}]
  %s3 = inlined_call_operand.vmem [shape: f32[1,32], index: 3, kind: input, shape index: {}]
  %s4 = inlined_call_operand.vmem [shape: f32[1,32], index: 4, kind: input, shape index: {}]
  %s5 = inlined_call_operand.vmem [shape: f32[56,32], index: 5, kind: input, shape index: {}]
  %s6 = inlined_call_operand.vmem [shape: f32[56,32], index: 6, kind: input, shape index: {}]
  %s7 = inlined_call_operand.vmem [shape: f32[2,56,32], index: 7, kind: output, shape index: {}]
  %s8 = sld [smem:[#allocation0]]
  $region61: #{data_embedding_forward.1} parent=0
    _
  %s10 = ssub.s32 1, %s8
  %s11 = scalar_select 0, %s10, %s8
  loop: start=0, step=1, limit=4
  $region2: #{data_embedding_forward.1} parent=0 // loop_pre_header
    _
  $region3: #{data_embedding_forward.1} parent=0 // loop_header
    %s13 = sphi 0, %s17
    %p14 = scmp.ge.s32.totalorder %s13, 4
    %s20 = sphi 0, %s32
    %s21 = sphi 0, %s28
    %s22 = sphi 0, %s20
    %s23 = sphi 0, %s21
    %s24 = sphi 0, %s22
    %s25 = sphi 0, %s23
    %s37 = sphi 0, %s39
    %s40 = sphi 0, %s37
    %s41 = sphi 0, %s40
    %s57 = sphi 0, %s41
    %s61 = sphi 0, %s61
    %s63 = sphi 0, %s61
    %s64 = sphi 0, %s63
    %s78 = sphi 0, %s64
    %s82 = sphi 0, %s82
    %s84 = sphi 0, %s82
    %s85 = sphi 0, %s84
    %s99 = sphi 0, %s85
    %s103 = sphi 0, %s103
    %s105 = sphi 0, %s103
    %s106 = sphi 0, %s105
    %s120 = sphi 0, %s106
    %s124 = sphi 0, %s124
    %s126 = sphi 0, %s124
    %s127 = sphi 0, %s126
    %s141 = sphi 0, %s127
    %s147 = sphi 0, %s149
    %s150 = sphi 0, %s147
    %s151 = sphi 0, %s150
    %s167 = sphi 0, %s151
    %s173 = sphi 0, %s175
    %s176 = sphi 0, %s173
    %s177 = sphi 0, %s176
    %s193 = sphi 0, %s177
    %s201 = sphi 0, %s203
    %s204 = sphi 0, %s201
    %s205 = sphi 0, %s204
    %s221 = sphi 0, %s205
  $region4: #{data_embedding_forward.1} parent=0 // loop_header_branch
    %16 = sbr.rel (%p14) target = $region8
  $region5: #{data_embedding_forward.1} parent=0 // loop_body
    %s18 = ssub.s32 %s13, 1
    %s19 = ssub.s32 %s13, 2
    %s26 = sadd.s32 1, %s21
    %p27 = scmp.ge.s32.totalorder %s26, 2
    %s28 = scalar_select %p27, 0, %s26
    %s29 = sadd.s32 1, %s20
    %s30 = scalar_select %p27, %s29, %s20
    %p31 = scmp.ge.s32.totalorder %s30, 1
    %s32 = scalar_select %p31, 0, %s30
    %s33 = ssub.s32 %s21, %s28
    %s34 = ssub.s32 %s20, %s32
    %s35 = sor.u32 %s33, %s34
    %p36 = scmp.eq.s32.totalorder %s35, 0
    %s38 = sadd.s32 %s37, 1
    %s39 = scalar_select %p36, %s37, %s38
    %p42 = pneg %p36
    %p43 = scmp.eq.s32.totalorder %s13, 1
    %p44 = por %p42, %p43
    %p45 = scmp.ne.s32.totalorder %s37, %s40
    %p46 = scmp.eq.s32.totalorder %s13, 0
    %p47 = por %p45, %p46
    %p48 = scmp.ne.s32.totalorder %s37, %s40
    %p49 = scmp.eq.s32.totalorder %s18, 1
    %p50 = por %p48, %p49
    %p51 = scmp.ne.s32.totalorder %s40, %s41
    %p52 = scmp.eq.s32.totalorder %s18, 0
    %p53 = por %p51, %p52
    %p54 = scmp.ne.s32.totalorder %s40, %s41
    %p55 = scmp.eq.s32.totalorder %s19, 1
    %p56 = por %p54, %p55
    %p58 = scmp.ne.s32.totalorder %s41, %s57
    %p59 = scmp.eq.s32.totalorder %s19, 0
    %p60 = por %p58, %p59
    %s62 = sadd.s32 %s61, 1
    %p65 = scmp.eq.s32.totalorder %s13, 1
    %p66 = scmp.ne.s32.totalorder %s61, %s63
    %p67 = scmp.eq.s32.totalorder %s13, 0
    %p68 = por %p66, %p67
    %p69 = scmp.ne.s32.totalorder %s61, %s63
    %p70 = scmp.eq.s32.totalorder %s18, 1
    %p71 = por %p69, %p70
    %p72 = scmp.ne.s32.totalorder %s63, %s64
    %p73 = scmp.eq.s32.totalorder %s18, 0
    %p74 = por %p72, %p73
    %p75 = scmp.ne.s32.totalorder %s63, %s64
    %p76 = scmp.eq.s32.totalorder %s19, 1
    %p77 = por %p75, %p76
    %p79 = scmp.ne.s32.totalorder %s64, %s78
    %p80 = scmp.eq.s32.totalorder %s19, 0
    %p81 = por %p79, %p80
    %s83 = sadd.s32 %s82, 1
    %p86 = scmp.eq.s32.totalorder %s13, 1
    %p87 = scmp.ne.s32.totalorder %s82, %s84
    %p88 = scmp.eq.s32.totalorder %s13, 0
    %p89 = por %p87, %p88
    %p90 = scmp.ne.s32.totalorder %s82, %s84
    %p91 = scmp.eq.s32.totalorder %s18, 1
    %p92 = por %p90, %p91
    %p93 = scmp.ne.s32.totalorder %s84, %s85
    %p94 = scmp.eq.s32.totalorder %s18, 0
    %p95 = por %p93, %p94
    %p96 = scmp.ne.s32.totalorder %s84, %s85
    %p97 = scmp.eq.s32.totalorder %s19, 1
    %p98 = por %p96, %p97
    %p100 = scmp.ne.s32.totalorder %s85, %s99
    %p101 = scmp.eq.s32.totalorder %s19, 0
    %p102 = por %p100, %p101
    %s104 = sadd.s32 %s103, 1
    %p107 = scmp.eq.s32.totalorder %s13, 1
    %p108 = scmp.ne.s32.totalorder %s103, %s105
    %p109 = scmp.eq.s32.totalorder %s13, 0
    %p110 = por %p108, %p109
    %p111 = scmp.ne.s32.totalorder %s103, %s105
    %p112 = scmp.eq.s32.totalorder %s18, 1
    %p113 = por %p111, %p112
    %p114 = scmp.ne.s32.totalorder %s105, %s106
    %p115 = scmp.eq.s32.totalorder %s18, 0
    %p116 = por %p114, %p115
    %p117 = scmp.ne.s32.totalorder %s105, %s106
    %p118 = scmp.eq.s32.totalorder %s19, 1
    %p119 = por %p117, %p118
    %p121 = scmp.ne.s32.totalorder %s106, %s120
    %p122 = scmp.eq.s32.totalorder %s19, 0
    %p123 = por %p121, %p122
    %s125 = sadd.s32 %s124, 1
    %p128 = scmp.eq.s32.totalorder %s13, 1
    %p129 = scmp.ne.s32.totalorder %s124, %s126
    %p130 = scmp.eq.s32.totalorder %s13, 0
    %p131 = por %p129, %p130
    %p132 = scmp.ne.s32.totalorder %s124, %s126
    %p133 = scmp.eq.s32.totalorder %s18, 1
    %p134 = por %p132, %p133
    %p135 = scmp.ne.s32.totalorder %s126, %s127
    %p136 = scmp.eq.s32.totalorder %s18, 0
    %p137 = por %p135, %p136
    %p138 = scmp.ne.s32.totalorder %s126, %s127
    %p139 = scmp.eq.s32.totalorder %s19, 1
    %p140 = por %p138, %p139
    %p142 = scmp.ne.s32.totalorder %s127, %s141
    %p143 = scmp.eq.s32.totalorder %s19, 0
    %p144 = por %p142, %p143
    %s145 = ssub.s32 %s20, %s32
    %p146 = scmp.eq.s32.totalorder %s145, 0
    %s148 = sadd.s32 %s147, 1
    %s149 = scalar_select %p146, %s147, %s148
    %p152 = pneg %p146
    %p153 = scmp.eq.s32.totalorder %s13, 1
    %p154 = por %p152, %p153
    %p155 = scmp.ne.s32.totalorder %s147, %s150
    %p156 = scmp.eq.s32.totalorder %s13, 0
    %p157 = por %p155, %p156
    %p158 = scmp.ne.s32.totalorder %s147, %s150
    %p159 = scmp.eq.s32.totalorder %s18, 1
    %p160 = por %p158, %p159
    %p161 = scmp.ne.s32.totalorder %s150, %s151
    %p162 = scmp.eq.s32.totalorder %s18, 0
    %p163 = por %p161, %p162
    %p164 = scmp.ne.s32.totalorder %s150, %s151
    %p165 = scmp.eq.s32.totalorder %s19, 1
    %p166 = por %p164, %p165
    %p168 = scmp.ne.s32.totalorder %s151, %s167
    %p169 = scmp.eq.s32.totalorder %s19, 0
    %p170 = por %p168, %p169
    %s171 = ssub.s32 %s20, %s32
    %p172 = scmp.eq.s32.totalorder %s171, 0
    %s174 = sadd.s32 %s173, 1
    %s175 = scalar_select %p172, %s173, %s174
    %p178 = pneg %p172
    %p179 = scmp.eq.s32.totalorder %s13, 1
    %p180 = por %p178, %p179
    %p181 = scmp.ne.s32.totalorder %s173, %s176
    %p182 = scmp.eq.s32.totalorder %s13, 0
    %p183 = por %p181, %p182
    %p184 = scmp.ne.s32.totalorder %s173, %s176
    %p185 = scmp.eq.s32.totalorder %s18, 1
    %p186 = por %p184, %p185
    %p187 = scmp.ne.s32.totalorder %s176, %s177
    %p188 = scmp.eq.s32.totalorder %s18, 0
    %p189 = por %p187, %p188
    %p190 = scmp.ne.s32.totalorder %s176, %s177
    %p191 = scmp.eq.s32.totalorder %s19, 1
    %p192 = por %p190, %p191
    %p194 = scmp.ne.s32.totalorder %s177, %s193
    %p195 = scmp.eq.s32.totalorder %s19, 0
    %p196 = por %p194, %p195
    %s197 = ssub.s32 %s21, %s28
    %s198 = ssub.s32 %s20, %s32
    %s199 = sor.u32 %s197, %s198
    %p200 = scmp.eq.s32.totalorder %s199, 0
    %s202 = sadd.s32 %s201, 1
    %s203 = scalar_select %p200, %s201, %s202
    %p206 = pneg %p200
    %p207 = scmp.eq.s32.totalorder %s13, 1
    %p208 = por %p206, %p207
    %p209 = scmp.ne.s32.totalorder %s201, %s204
    %p210 = scmp.eq.s32.totalorder %s13, 0
    %p211 = por %p209, %p210
    %p212 = scmp.ne.s32.totalorder %s201, %s204
    %p213 = scmp.eq.s32.totalorder %s18, 1
    %p214 = por %p212, %p213
    %p215 = scmp.ne.s32.totalorder %s204, %s205
    %p216 = scmp.eq.s32.totalorder %s18, 0
    %p217 = por %p215, %p216
    %p218 = scmp.ne.s32.totalorder %s204, %s205
    %p219 = scmp.eq.s32.totalorder %s19, 1
    %p220 = por %p218, %p219
    %p222 = scmp.ne.s32.totalorder %s205, %s221
    %p223 = scmp.eq.s32.totalorder %s19, 0
    %p224 = por %p222, %p223
    %p225 = scmp.le.s32.totalorder 1, %s13
    %p226 = scmp.lt.s32.totalorder %s13, 3
    %p227 = pnand %p225, %p226
    %p228 = pneg %p227
    // Predicated region
    $region9: #{data_embedding_forward.1} parent=5 // pred_check
      _
    $region10: #{data_embedding_forward.1} parent=5 // pred_check_branch
      %230 = sbr.rel (%p227) target = $region12
    $region11: #{data_embedding_forward.1} parent=5 // pred_region
      %s231 = ssub.s32 %s13, 1
      // Predicated region
      $region13: #{data_embedding_forward.1} parent=11 // pred_check
        %p232 = pneg %p74
      $region14: #{data_embedding_forward.1} parent=11 // pred_check_branch
        %234 = sbr.rel (%p232) target = $region16
      $region15: #{data_embedding_forward.1} parent=11 // pred_region
        _
      $region16: #{data_embedding_forward.1} parent=11 // pred_fallthru
        _
      // Predicated region
      $region17: #{data_embedding_forward.1} parent=11 // pred_check
        %p235 = pneg %p95
      $region18: #{data_embedding_forward.1} parent=11 // pred_check_branch
        %237 = sbr.rel (%p235) target = $region20
      $region19: #{data_embedding_forward.1} parent=11 // pred_region
        _
      $region20: #{data_embedding_forward.1} parent=11 // pred_fallthru
        _
      // Predicated region
      $region21: #{data_embedding_forward.1} parent=11 // pred_check
        %p238 = pneg %p116
      $region22: #{data_embedding_forward.1} parent=11 // pred_check_branch
        %240 = sbr.rel (%p238) target = $region24
      $region23: #{data_embedding_forward.1} parent=11 // pred_region
        _
      $region24: #{data_embedding_forward.1} parent=11 // pred_fallthru
        _
      // Predicated region
      $region25: #{data_embedding_forward.1} parent=11 // pred_check
        %p241 = pneg %p137
      $region26: #{data_embedding_forward.1} parent=11 // pred_check_branch
        %243 = sbr.rel (%p241) target = $region28
      $region27: #{data_embedding_forward.1} parent=11 // pred_region
        _
      $region28: #{data_embedding_forward.1} parent=11 // pred_fallthru
        _
      // Predicated region
      $region29: #{data_embedding_forward.1} parent=11 // pred_check
        %p244 = pneg %p163
      $region30: #{data_embedding_forward.1} parent=11 // pred_check_branch
        %246 = sbr.rel (%p244) target = $region32
      $region31: #{data_embedding_forward.1} parent=11 // pred_region
        %s247 = smul.u32 7, %s22
        %p248 = scmp.lt.s32.totalorder %s247, 6
        %s249 = scalar_select %p248, %s247, 6
        %s250 = smul.addr %s249, 8
        %s251 = scalar_lea.vmem %s5, %s250
        %s252 = smul.u32 7, %s22
      $region32: #{data_embedding_forward.1} parent=11 // pred_fallthru
        _
      // Predicated region
      $region33: #{data_embedding_forward.1} parent=11 // pred_check
        %p253 = pneg %p189
      $region34: #{data_embedding_forward.1} parent=11 // pred_check_branch
        %255 = sbr.rel (%p253) target = $region36
      $region35: #{data_embedding_forward.1} parent=11 // pred_region
        %s256 = smul.u32 7, %s22
        %p257 = scmp.lt.s32.totalorder %s256, 6
        %s258 = scalar_select %p257, %s256, 6
        %s259 = smul.addr %s258, 8
        %s260 = scalar_lea.vmem %s6, %s259
        %s261 = smul.u32 7, %s22
      $region36: #{data_embedding_forward.1} parent=11 // pred_fallthru
        _
    $region12: #{data_embedding_forward.1} parent=5 // pred_fallthru
      _
    %p262 = scmp.lt.s32.totalorder %s13, 2
    // Predicated region
    $region37: #{data_embedding_forward.1} parent=5 // pred_check
      %p263 = pneg %p262
    $region38: #{data_embedding_forward.1} parent=5 // pred_check_branch
      %265 = sbr.rel (%p263) target = $region40
    $region39: #{data_embedding_forward.1} parent=5 // pred_region
      // Predicated region
      $region41: #{data_embedding_forward.1} parent=39 // pred_check
        %p266 = pneg %p47
      $region42: #{data_embedding_forward.1} parent=39 // pred_check_branch
        %268 = sbr.rel (%p266) target = $region44
      $region43: #{data_embedding_forward.1} parent=39 // pred_region
        %s269 = smul.u32 7, %s20
        %p270 = scmp.lt.s32.totalorder %s21, 1
        %s271 = scalar_select %p270, %s21, 1
        %p272 = scmp.lt.s32.totalorder %s269, 6
        %s273 = scalar_select %p272, %s269, 6
        %s274 = smul.addr %s271, 7
        %s275 = sadd.s32 %s273, %s274
        %s276 = smul.addr %s275, 4
        %s277 = scalar_lea.vmem %s0, %s276
        %s278 = smul.u32 7, %s20
      $region44: #{data_embedding_forward.1} parent=39 // pred_fallthru
        _
    $region40: #{data_embedding_forward.1} parent=5 // pred_fallthru
      _
    %p279 = scmp.le.s32.totalorder 1, %s13
    %p280 = scmp.lt.s32.totalorder %s13, 3
    %p281 = pnand %p279, %p280
    %p282 = pneg %p281
    // Predicated region
    $region45: #{data_embedding_forward.1} parent=5 // pred_check
      _
    $region46: #{data_embedding_forward.1} parent=5 // pred_check_branch
      %284 = sbr.rel (%p281) target = $region48
    $region47: #{data_embedding_forward.1} parent=5 // pred_region
      %s285 = ssub.s32 %s13, 1
      %s286 = smul.u32 7, %s22
      %p287 = scmp.lt.s32.totalorder %s23, 1
      %s288 = scalar_select %p287, %s23, 1
      %p289 = scmp.lt.s32.totalorder %s286, 6
      %s290 = scalar_select %p289, %s286, 6
      %s291 = smul.addr %s288, 7
      %s292 = sadd.s32 %s290, %s291
      %s293 = smul.addr %s292, 4
      %s294 = scalar_lea.vmem %s0, %s293
      %p295 = pneg %p53
      %p296 = pneg %p50
      %p297 = pneg %p74
      %p298 = pneg %p71
      %p299 = pneg %p95
      %p300 = pneg %p92
      %p301 = pneg %p116
      %p302 = pneg %p113
      %p303 = pneg %p137
      %p304 = pneg %p134
      %s305 = smul.u32 7, %s22
      %p306 = scmp.lt.s32.totalorder %s305, 6
      %s307 = scalar_select %p306, %s305, 6
      %s308 = smul.addr %s307, 8
      %s309 = scalar_lea.vmem %s5, %s308
      %p310 = pneg %p163
      %p311 = pneg %p160
      %s312 = smul.u32 7, %s22
      %p313 = scmp.lt.s32.totalorder %s312, 6
      %s314 = scalar_select %p313, %s312, 6
      %s315 = smul.addr %s314, 8
      %s316 = scalar_lea.vmem %s6, %s315
      %p317 = pneg %p189
      %p318 = pneg %p186
      %p319 = pneg %p217
      %p320 = pneg %p214
      %s321 = smul.u32 7, %s22
      %p322 = scmp.lt.s32.totalorder %s23, 1
      %s323 = scalar_select %p322, %s23, 1
      %p324 = scmp.lt.s32.totalorder %s321, 6
      %s325 = scalar_select %p324, %s321, 6
      %s326 = smul.addr %s323, 7
      %s327 = sadd.s32 %s325, %s326
      %s328 = smul.addr %s327, 8
      %s329 = scalar_lea.vmem %s7, %s328
      %s330 = smul.u32 7, %s22
      %p331 = scmp.lt.s32.totalorder %s23, 1
      %s332 = scalar_select %p331, %s23, 1
      %p333 = scmp.lt.s32.totalorder %s330, 6
      %s334 = scalar_select %p333, %s330, 6
      %s335 = smul.addr %s332, 7
      %s336 = sadd.s32 %s334, %s335
      %s337 = smul.addr %s336, 4
      %s338 = scalar_lea.vmem %s0, %s337
      %s339 = smul.u32 7, %s22
      %s340 = smul.u32 7, %s22
      %p341 = scmp.lt.s32.totalorder %s340, 6
      %s342 = scalar_select %p341, %s340, 6
      %s343 = smul.addr %s342, 8
      %s344 = scalar_lea.vmem %s5, %s343
      %s345 = smul.u32 7, %s22
      %s346 = smul.u32 7, %s22
      %p347 = scmp.lt.s32.totalorder %s346, 6
      %s348 = scalar_select %p347, %s346, 6
      %s349 = smul.addr %s348, 8
      %s350 = scalar_lea.vmem %s6, %s349
      %s351 = smul.u32 7, %s22
      %s352 = smul.u32 7, %s22
      %p353 = scmp.lt.s32.totalorder %s23, 1
      %s354 = scalar_select %p353, %s23, 1
      %p355 = scmp.lt.s32.totalorder %s352, 6
      %s356 = scalar_select %p355, %s352, 6
      %s357 = smul.addr %s354, 7
      %s358 = sadd.s32 %s356, %s357
      %s359 = smul.addr %s358, 8
      %s360 = scalar_lea.vmem %s7, %s359
      %s361 = smul.u32 7, %s22
      %v363 = vld [vmem:[%s338] sm:$0xf]
      %v364 = vld [vmem:[%s338 + $0x4] sm:$0xf]
      %v365 = vld [vmem:[%s338 + $0x8] sm:$0xf]
      %v366 = vld [vmem:[%s338 + $0xc] sm:$0xf]
      %v367 = vld [vmem:[%s338 + $0x10] sm:$0xf]
      %v368 = vld [vmem:[%s338 + $0x14] sm:$0xf]
      %v369 = vld [vmem:[%s338 + $0x18] sm:$0xf]
      %v370 = vld [vmem:[%s1] sm:$0xf]
      %v371 = vld [vmem:[%s1 + $0x4] sm:$0x3]
      %v372 = vld [vmem:[%s3] sm:$0x1]
      %v374 = vperm.slane %v372, 0
      %v383 = vunpack.c.l.b16 %v363
      %v384 = vunpack.c.l.b16 %v364
      %v385 = vunpack.c.l.b16 %v365
      %v386 = vunpack.c.l.b16 %v366
      %v387 = vunpack.c.l.b16 %v367
      %v388 = vunpack.c.l.b16 %v368
      %v389 = vunpack.c.l.b16 %v369
      %v390 = vpack.c.b16 %v384, %v383
      %v391 = vpack.c.b16 %v386, %v385
      %v392 = vpack.c.b16 %v388, %v387
      %v393 = vpack.c.b16 %v389, %v389
      %v396 = vunpack.c.l.b16 %v370
      %v397 = vunpack.c.l.b16 %v371
      %v398 = vpack.c.b16 %v397, %v396
      %vm399 = vcmask 97280
      %v401 = vsel %vm399, %v390, 0
      %v404 = vsel %vm399, %v391, 0
      %v407 = vsel %vm399, %v392, 0
      %v410 = vsel %vm399, %v393, 0
      %vm412 = vcmask 1045504
      %v414 = vsel %vm412, %v398, 0
      %416 = vmatpush.bf16.msra.mxu0 0
      %417 = vmatpush.bf16.msra.mxu0 0
      %418 = vmatpush.bf16.msra.mxu0 0
      %419 = vmatpush.bf16.msra.mxu0 0
      %420 = vmatpush.bf16.msra.mxu0 0
      %421 = vmatpush.bf16.msra.mxu0 0
      %422 = vmatpush.bf16.msra.mxu0 0
      %423 = vmatpush.bf16.msra.mxu0 %v414
      %424 = vmatmul.bf16.gmra.mxu0 %v401
      %v425 = vpop.f32.mrf.mxu0
      %v426 = vadd.f32 %v374, %v425
      %v427 = vpop.f32.mrf.mxu0
      %v428 = vadd.f32 %v374, %v427
      %429 = vmatmul.bf16.gmra.mxu0 %v404
      %v430 = vpop.f32.mrf.mxu0
      %v431 = vadd.f32 %v374, %v430
      %v432 = vpop.f32.mrf.mxu0
      %v433 = vadd.f32 %v374, %v432
      %434 = vmatmul.bf16.gmra.mxu0 %v407
      %v435 = vpop.f32.mrf.mxu0
      %v436 = vadd.f32 %v374, %v435
      %v437 = vpop.f32.mrf.mxu0
      %v438 = vadd.f32 %v374, %v437
      %439 = vmatmul.bf16.gmra.mxu0 %v410
      %v440 = vpop.f32.mrf.mxu0
      %v441 = vadd.f32 %v374, %v440
      %v442 = vpop.f32.mrf.mxu0
      %443 = vdwg.mxu0
      %v444 = vld [vmem:[%s2] sm:$0xf]
      %v445 = vld [vmem:[%s2 + $0x4] sm:$0x3]
      %v446 = vld [vmem:[%s4] sm:$0x1]
      %v448 = vperm.slane %v446, 0
      %v452 = vunpack.c.l.b16 %v444
      %v453 = vunpack.c.l.b16 %v445
      %v454 = vpack.c.b16 %v453, %v452
      %v456 = vsel %vm412, %v454, 0
      %458 = vmatpush.bf16.msra.mxu0 0
      %459 = vmatpush.bf16.msra.mxu0 0
      %460 = vmatpush.bf16.msra.mxu0 0
      %461 = vmatpush.bf16.msra.mxu0 0
      %462 = vmatpush.bf16.msra.mxu0 0
      %463 = vmatpush.bf16.msra.mxu0 0
      %464 = vmatpush.bf16.msra.mxu0 0
      %465 = vmatpush.bf16.msra.mxu0 %v456
      %466 = vmatmul.bf16.gmra.mxu0 %v401
      %v467 = vpop.f32.mrf.mxu0
      %v468 = vadd.f32 %v448, %v467
      %v469 = vpop.f32.mrf.mxu0
      %v470 = vadd.f32 %v448, %v469
      %471 = vmatmul.bf16.gmra.mxu0 %v404
      %v472 = vpop.f32.mrf.mxu0
      %v473 = vadd.f32 %v448, %v472
      %v474 = vpop.f32.mrf.mxu0
      %v475 = vadd.f32 %v448, %v474
      %476 = vmatmul.bf16.gmra.mxu0 %v407
      %v477 = vpop.f32.mrf.mxu0
      %v478 = vadd.f32 %v448, %v477
      %v479 = vpop.f32.mrf.mxu0
      %v480 = vadd.f32 %v448, %v479
      %481 = vmatmul.bf16.gmra.mxu0 %v410
      %v482 = vpop.f32.mrf.mxu0
      %v483 = vadd.f32 %v448, %v482
      %v484 = vpop.f32.mrf.mxu0
      %485 = vdwg.mxu0
      %v486 = vld [vmem:[%s344] sm:$0xff]
      %v487 = vld [vmem:[%s344 + $0x8] sm:$0xff]
      %v488 = vld [vmem:[%s344 + $0x10] sm:$0xff]
      %v489 = vld [vmem:[%s344 + $0x18] sm:$0xff]
      %v490 = vld [vmem:[%s344 + $0x20] sm:$0xff]
      %v491 = vld [vmem:[%s344 + $0x28] sm:$0xff]
      %v492 = vld [vmem:[%s344 + $0x30] sm:$0xff]
      %v493 = vmul.f32 %v426, %v486
      %v494 = vmul.f32 %v428, %v487
      %v495 = vmul.f32 %v431, %v488
      %v496 = vmul.f32 %v433, %v489
      %v497 = vmul.f32 %v436, %v490
      %v498 = vmul.f32 %v438, %v491
      %v499 = vmul.f32 %v441, %v492
      %v500 = vld [vmem:[%s350] sm:$0xff]
      %v501 = vld [vmem:[%s350 + $0x8] sm:$0xff]
      %v502 = vld [vmem:[%s350 + $0x10] sm:$0xff]
      %v503 = vld [vmem:[%s350 + $0x18] sm:$0xff]
      %v504 = vld [vmem:[%s350 + $0x20] sm:$0xff]
      %v505 = vld [vmem:[%s350 + $0x28] sm:$0xff]
      %v506 = vld [vmem:[%s350 + $0x30] sm:$0xff]
      %v507 = vmul.f32 %v468, %v500
      %v508 = vmul.f32 %v470, %v501
      %v509 = vmul.f32 %v473, %v502
      %v510 = vmul.f32 %v475, %v503
      %v511 = vmul.f32 %v478, %v504
      %v512 = vmul.f32 %v480, %v505
      %v513 = vmul.f32 %v483, %v506
      %v514 = vadd.f32 %v493, %v507
      %v515 = vadd.f32 %v494, %v508
      %v516 = vadd.f32 %v495, %v509
      %v517 = vadd.f32 %v496, %v510
      %v518 = vadd.f32 %v497, %v511
      %v519 = vadd.f32 %v498, %v512
      %v520 = vadd.f32 %v499, %v513
      %vm521 = vcmask 261120
      %522 = vst.msk [vmem:[%s360] sm:$0xff] %vm521, %v514
      %523 = vst.msk [vmem:[%s360 + $0x8] sm:$0xff] %vm521, %v515
      %524 = vst.msk [vmem:[%s360 + $0x10] sm:$0xff] %vm521, %v516
      %525 = vst.msk [vmem:[%s360 + $0x18] sm:$0xff] %vm521, %v517
      %526 = vst.msk [vmem:[%s360 + $0x20] sm:$0xff] %vm521, %v518
      %527 = vst.msk [vmem:[%s360 + $0x28] sm:$0xff] %vm521, %v519
      %528 = vst.msk [vmem:[%s360 + $0x30] sm:$0xff] %vm521, %v520
      %s529 = smul.u32 7, %s22
      %p530 = scmp.lt.s32.totalorder %s23, 1
      %s531 = scalar_select %p530, %s23, 1
      %p532 = scmp.lt.s32.totalorder %s529, 6
      %s533 = scalar_select %p532, %s529, 6
      %s534 = smul.addr %s531, 7
      %s535 = sadd.s32 %s533, %s534
      %s536 = smul.addr %s535, 8
      %s537 = scalar_lea.vmem %s7, %s536
      // Predicated region
      $region49: #{data_embedding_forward.1} parent=47 // pred_check
        %p538 = pneg %p214
      $region50: #{data_embedding_forward.1} parent=47 // pred_check_branch
        %540 = sbr.rel (%p538) target = $region52
      $region51: #{data_embedding_forward.1} parent=47 // pred_region
        %s541 = smul.u32 7, %s22
      $region52: #{data_embedding_forward.1} parent=47 // pred_fallthru
        _
    $region48: #{data_embedding_forward.1} parent=5 // pred_fallthru
      _
    %p542 = scmp.le.s32.totalorder 2, %s13
    // Predicated region
    $region53: #{data_embedding_forward.1} parent=5 // pred_check
      %p543 = pneg %p542
    $region54: #{data_embedding_forward.1} parent=5 // pred_check_branch
      %545 = sbr.rel (%p543) target = $region56
    $region55: #{data_embedding_forward.1} parent=5 // pred_region
      %s546 = ssub.s32 %s13, 2
      // Predicated region
      $region57: #{data_embedding_forward.1} parent=55 // pred_check
        %p547 = pneg %p220
      $region58: #{data_embedding_forward.1} parent=55 // pred_check_branch
        %549 = sbr.rel (%p547) target = $region60
      $region59: #{data_embedding_forward.1} parent=55 // pred_region
        %s550 = smul.u32 7, %s24
        %p551 = scmp.lt.s32.totalorder %s25, 1
        %s552 = scalar_select %p551, %s25, 1
        %p553 = scmp.lt.s32.totalorder %s550, 6
        %s554 = scalar_select %p553, %s550, 6
        %s555 = smul.addr %s552, 7
        %s556 = sadd.s32 %s554, %s555
        %s557 = smul.addr %s556, 8
        %s558 = scalar_lea.vmem %s7, %s557
      $region60: #{data_embedding_forward.1} parent=55 // pred_fallthru
        _
    $region56: #{data_embedding_forward.1} parent=5 // pred_fallthru
      _
  $region6: #{data_embedding_forward.1} parent=0 // loop_footer
    %s17 = sadd.s32 1, %s13
  $region7: #{data_embedding_forward.1} parent=0 // loop_footer_branch
    %12 = sbr.rel target = $region3
  $region8: #{data_embedding_forward.1} parent=0 // loop_exit
    _

</llo_original>
